<compile_context>
chip_gen: v6e
topology: v6e:2x2x1
jax: 0.10.0
libtpu: 0.0.40
codegen_flags: <defaults>
</compile_context>

<pallas_src>
import functools
import math

import jax
import jax.numpy as jnp
from jax.experimental import pallas as pl
from jax.experimental.pallas import tpu as pltpu

LN_EPS = 1e-5            # PyTorch nn.LayerNorm default
LANE = 128               # TPU lane width
SUBLANE = 16             # bf16 sublane packing
MAX_ROW_TILE = 512       # only used by the (tiny) MLP decoder row tiling
MEAN_ROWS = 8            # sublane-aligned carrier for the per-batch mean row

_CPARAMS = pltpu.CompilerParams(dimension_semantics=("parallel",))


# ----------------------------------------------------------------------------
# small helpers
# ----------------------------------------------------------------------------
def _round_up(x, m):
    return ((x + m - 1) // m) * m


def _pick_row_tile(m, max_tile=MAX_ROW_TILE):
    """No padding when m fits one tile; otherwise balanced tiles so padding
    stays within one sublane multiple (avoids the round_up(m, rt) blow-up)."""
    if m <= max_tile:
        return m, m
    n_tiles = -(-m // max_tile)
    rt = _round_up(-(-m // n_tiles), SUBLANE)
    return rt, rt * (-(-m // rt))


def _pad_rows(a, rows):
    if rows == a.shape[0]:
        return a
    return jnp.pad(a, ((0, rows - a.shape[0]), (0, 0)))


def _pad2(a, rows, cols, dtype):
    out = jnp.zeros((rows, cols), dtype)
    return out.at[: a.shape[0], : a.shape[1]].set(a.astype(dtype))


def _const(a):
    return pl.BlockSpec(a.shape, lambda i: (0,) * a.ndim)


def _rows(rt, width):
    return pl.BlockSpec((rt, width), lambda i: (i, 0))


def _layernorm(v, gamma, beta, n_real):
    """LayerNorm over the last axis. Lanes >= n_real of `v` must be exactly 0,
    so sum/n_real and E[x^2]-mu^2 give the statistics of the real channels."""
    mu = jnp.sum(v, axis=-1, keepdims=True) / n_real
    var = jnp.sum(v * v, axis=-1, keepdims=True) / n_real - mu * mu
    return (v - mu) * jax.lax.rsqrt(var + LN_EPS) * gamma + beta


def _shift_rows(v, d):
    """Causal dilation shift applied post-matmul: out[t] = v[t-d], 0 for t<d."""
    L = v.shape[0]
    if d == 0:
        return v
    if d >= L:
        return jnp.zeros_like(v)
    return jnp.concatenate(
        [jnp.zeros((d,) + v.shape[1:], v.dtype), v[: L - d]], axis=0)


# ----------------------------------------------------------------------------
# Pallas kernels
# ----------------------------------------------------------------------------
def _temporal_block_kernel(x_ref, w1_ref, w2_ref, bias_ref, o_ref, mean_ref,
                           *, shifts, coutp, has_down, inv_len):
    # x:    (1, L, cinp) bf16 (one batch element, full sequence)
    # w1:   (cinp, K*coutp [+ coutp]) bf16 = [tap0 | tap1 | ... | (Wd)]
    # w2:   (coutp, K*coutp) bf16
    # bias: (3, coutp) f32 rows = b1, b2, bd
    x = x_ref[0]                                     # (L, cinp)
    bias = bias_ref[...]
    K = len(shifts)

    # conv1: every tap (and the downsample) shares LHS x -> one MXU call.
    t1 = jnp.dot(x, w1_ref[...], preferred_element_type=jnp.float32)
    h = bias[0:1, :] + _shift_rows(t1[:, :coutp], shifts[0])
    for k in range(1, K):
        h = h + _shift_rows(t1[:, k * coutp:(k + 1) * coutp], shifts[k])
    h = jnp.maximum(h, 0.0)                          # stays in VMEM/vregs

    hb = h.astype(x.dtype)
    t2 = jnp.dot(hb, w2_ref[...], preferred_element_type=jnp.float32)
    y = bias[1:2, :] + _shift_rows(t2[:, :coutp], shifts[0])
    for k in range(1, K):
        y = y + _shift_rows(t2[:, k * coutp:(k + 1) * coutp], shifts[k])
    y = jnp.maximum(y, 0.0)

    if has_down:
        res = t1[:, K * coutp:] + bias[2:3, :]       # 1x1-conv downsample
    else:
        res = x.astype(jnp.float32)                  # cin == cout: identity

    out = jnp.maximum(y + res, 0.0)
    o_ref[0] = out.astype(o_ref.dtype)
    msum = jnp.sum(out, axis=0, keepdims=True) * inv_len
    mean_ref[0] = jnp.broadcast_to(msum, (mean_ref.shape[1], mean_ref.shape[2]))


def _mlp_kernel(x_ref, wcat_ref, p1_ref, w2_ref, p2_ref, wf_ref, o_ref, of_ref,
                *, hidden, cout, hpad, linear_shortcut):
    # x:    (TM, Cin_p) bf16
    # wcat: (Cin_p, hpad [+ cpad]) bf16  = [W1 | Ws]  (shared-LHS matmuls fused)
    # p1 rows: 0 = b1|bs, 1 = gamma1|gamma_s, 2 = beta1|beta_s   (f32)
    # w2:   (hpad, cpad) bf16
    # p2 rows: 0 = b2, 1 = gamma2, 2 = beta2, 3 = final-head bias in lane 0
    # wf:   (cpad, LANE) bf16 with the (cout, 1) final weight in column 0
    x = x_ref[...]
    p1 = p1_ref[...]
    p2 = p2_ref[...]

    y = jnp.dot(x, wcat_ref[...], preferred_element_type=jnp.float32) + p1[0:1, :]

    h = _layernorm(y[:, :hpad], p1[1:2, :hpad], p1[2:3, :hpad], hidden)
    h = jnp.maximum(h, 0.0)

    o = jnp.dot(h.astype(w2_ref.dtype), w2_ref[...],
                preferred_element_type=jnp.float32) + p2[0:1, :]
    o = _layernorm(o, p2[1:2, :], p2[2:3, :], cout)

    if linear_shortcut:
        s = _layernorm(y[:, hpad:], p1[1:2, hpad:], p1[2:3, hpad:], cout)
    else:
        s = x.astype(jnp.float32)        # in_channel == out_channel -> identity

    out = jnp.maximum(o + s, 0.0)
    o_ref[...] = out
    of_ref[...] = (jnp.dot(out.astype(wf_ref.dtype), wf_ref[...],
                           preferred_element_type=jnp.float32) + p2[3:4, :])


# ----------------------------------------------------------------------------
# pallas_call wrappers
# ----------------------------------------------------------------------------
def _temporal_block(a, lvl):
    """One fused TemporalBlock: a (B, L, cinp) bf16 -> ((B, L, coutp) bf16,
    per-batch mean over L (B, coutp) f32).  Grid over batch ('parallel')."""
    B, L, cinp = a.shape
    coutp = lvl['coutp']
    d, ks = lvl['dilation'], lvl['ksize']
    shifts = tuple((ks - 1 - k) * d for k in range(ks))
    kernel = functools.partial(_temporal_block_kernel, shifts=shifts,
                               coutp=coutp, has_down=lvl['has_down'],
                               inv_len=1.0 / L)
    out, mean = pl.pallas_call(
        kernel,
        out_shape=(jax.ShapeDtypeStruct((B, L, coutp), jnp.bfloat16),
                   jax.ShapeDtypeStruct((B, MEAN_ROWS, coutp), jnp.float32)),
        grid_spec=pltpu.PrefetchScalarGridSpec(
            num_scalar_prefetch=0,
            grid=(B,),
            in_specs=[pl.BlockSpec((1, L, cinp), lambda b: (b, 0, 0)),
                      _const(lvl['w1']), _const(lvl['w2']), _const(lvl['bias'])],
            out_specs=(pl.BlockSpec((1, L, coutp), lambda b: (b, 0, 0)),
                       pl.BlockSpec((1, MEAN_ROWS, coutp), lambda b: (b, 0, 0)))),
        compiler_params=_CPARAMS,
    )(a, lvl['w1'], lvl['w2'], lvl['bias'])
    return out, mean[:, 0, :]


def _mlp_decoder(x, mp):
    """x: (m, Cin_p) bf16 (zero-padded lanes). Returns (outputs, final)."""
    m, cinp = x.shape
    hpad, cpad = mp['w2'].shape
    rt, m_pad = _pick_row_tile(m)
    xp = _pad_rows(x, m_pad)
    kernel = functools.partial(
        _mlp_kernel, hidden=mp['hidden'], cout=mp['cout'], hpad=hpad,
        linear_shortcut=mp['linear_shortcut'])
    out, fin = pl.pallas_call(
        kernel,
        out_shape=(jax.ShapeDtypeStruct((m_pad, cpad), jnp.float32),
                   jax.ShapeDtypeStruct((m_pad, LANE), jnp.float32)),
        grid_spec=pltpu.PrefetchScalarGridSpec(
            num_scalar_prefetch=0,
            grid=(m_pad // rt,),
            in_specs=[_rows(rt, cinp), _const(mp['wcat']), _const(mp['p1']),
                      _const(mp['w2']), _const(mp['p2']), _const(mp['wf'])],
            out_specs=(_rows(rt, cpad), _rows(rt, LANE))),
        compiler_params=_CPARAMS,
    )(xp, mp['wcat'], mp['p1'], mp['w2'], mp['p2'], mp['wf'])
    return out[:m, :mp['cout']], fin[:m, 0]


# ----------------------------------------------------------------------------
# parameter construction (raw f32 params + padded/bf16 device params)
# ----------------------------------------------------------------------------
def init_tcn_params(key, embed_size, num_channels, kernel_size=2):
    assert num_channels[-1] == embed_size, "TCN.forward requires C_last == embed_size"
    ks = jax.random.split(key, 16)
    kit = iter(ks)

    def xavier(k, fi, fo):
        b = math.sqrt(6.0 / (fi + fo))
        return jax.random.uniform(k, (fi, fo), jnp.float32, -b, b)

    def unif(k, shape, fan_in):
        b = 1.0 / math.sqrt(fan_in)
        return jax.random.uniform(k, shape, jnp.float32, -b, b)

    E = embed_size
    p = {'embed_size': E,
         'enc_x': 0.01 * jax.random.normal(next(kit), (200, E), jnp.float32),
         'enc_y': jax.random.normal(next(kit), (200, E), jnp.float32),   # not re-init in PyTorch
         'enc_z1': 0.01 * jax.random.normal(next(kit), (2, E), jnp.float32),
         'enc_z2': 0.01 * jax.random.normal(next(kit), (2, E), jnp.float32),
         'enc_z3': 0.01 * jax.random.normal(next(kit), (3, E), jnp.float32)}

    levels = []
    cin = 2 * E
    for i, cout in enumerate(num_channels):
        k1, k2, k3, kb1, kb2, kb3 = jax.random.split(next(kit), 6)
        levels.append({
            'dilation': 2 ** i, 'cin': cin, 'cout': cout,
            # weight_norm is a reparameterisation; at init the effective conv
            # weight equals the N(0, 0.01) sample used directly here.
            'w1': 0.01 * jax.random.normal(k1, (kernel_size, cin, cout), jnp.float32),
            'b1': unif(kb1, (cout,), cin * kernel_size),
            'w2': 0.01 * jax.random.normal(k2, (kernel_size, cout, cout), jnp.float32),
            'b2': unif(kb2, (cout,), cout * kernel_size),
            'wd': None if cin == cout else 0.01 * jax.random.normal(k3, (cin, cout), jnp.float32),
            'bd': None if cin == cout else unif(kb3, (cout,), cin),
        })
        cin = cout
    p['levels'] = levels

    # decoder = MLP(embed_size, 16, 64) ; final head = Linear(16, 1)
    din, dh, dout = E, 64, 16
    km1, km2, kms, kf, kfb = jax.random.split(next(kit), 5)
    p['mlp'] = {
        'cin': din, 'hidden': dh, 'cout': dout,
        'w1': xavier(km1, din, dh), 'b1': jnp.full((dh,), 0.01, jnp.float32),
        'g1': jnp.ones((dh,), jnp.float32), 'be1': jnp.zeros((dh,), jnp.float32),
        'w2': xavier(km2, dh, dout), 'b2': jnp.full((dout,), 0.01, jnp.float32),
        'g2': jnp.ones((dout,), jnp.float32), 'be2': jnp.zeros((dout,), jnp.float32),
        'ws': None if din == dout else xavier(kms, din, dout),
        'bs': None if din == dout else jnp.full((dout,), 0.01, jnp.float32),
        'gs': None if din == dout else jnp.ones((dout,), jnp.float32),
        'bes': None if din == dout else jnp.zeros((dout,), jnp.float32),
    }
    p['wf'] = unif(kf, (dout, 1), dout)
    p['bf'] = unif(kfb, (1,), dout)
    return p


def prepare_device_params(raw):
    """Zero-pad channels to 128 lanes, cast matmul weights to bf16 and pack
    shared-LHS matmuls side by side.  Zero padding everywhere is load-bearing
    (keeps padded lanes of every activation exactly 0)."""
    bf = jnp.bfloat16
    dev = {'embed_size': raw['embed_size']}
    for k in ('enc_x', 'enc_y', 'enc_z1', 'enc_z2', 'enc_z3'):
        dev[k] = raw[k]

    levels = []
    for lvl in raw['levels']:
        cin, cout = lvl['cin'], lvl['cout']
        ks = lvl['w1'].shape[0]
        cinp, coutp = _round_up(cin, LANE), _round_up(cout, LANE)
        has_down = lvl['wd'] is not None

        # conv1 taps (+ downsample) packed along N: one lane-dense MXU call.
        n1 = ks * coutp + (coutp if has_down else 0)
        w1 = jnp.zeros((cinp, n1), bf)
        for k in range(ks):
            w1 = w1.at[:cin, k * coutp:k * coutp + cout].set(lvl['w1'][k].astype(bf))
        if has_down:
            w1 = w1.at[:cin, ks * coutp:ks * coutp + cout].set(lvl['wd'].astype(bf))

        w2 = jnp.zeros((coutp, ks * coutp), bf)
        for k in range(ks):
            w2 = w2.at[:cout, k * coutp:k * coutp + cout].set(lvl['w2'][k].astype(bf))

        bias = jnp.zeros((3, coutp), jnp.float32)
        bias = bias.at[0, :cout].set(lvl['b1']).at[1, :cout].set(lvl['b2'])
        if has_down:
            bias = bias.at[2, :cout].set(lvl['bd'])
        else:
            assert cinp == coutp, "identity residual requires equal padded widths"

        levels.append({'dilation': lvl['dilation'], 'ksize': ks, 'cinp': cinp,
                       'coutp': coutp, 'has_down': has_down,
                       'w1': w1, 'w2': w2, 'bias': bias})
    dev['levels'] = levels

    m = raw['mlp']
    cin, hid, cout = m['cin'], m['hidden'], m['cout']
    cinp, hpad, cpad = _round_up(cin, LANE), _round_up(hid, LANE), _round_up(cout, LANE)
    assert cpad == LANE, "decoder out_channel must fit a single lane group"
    assert levels[-1]['coutp'] == cinp, "TCN output width must feed the decoder"
    linear_shortcut = m['ws'] is not None

    if linear_shortcut:
        wcat = jnp.zeros((cinp, hpad + cpad), jnp.bfloat16)
        wcat = wcat.at[:cin, :hid].set(m['w1'].astype(bf))
        wcat = wcat.at[:cin, hpad:hpad + cout].set(m['ws'].astype(bf))
        p1 = jnp.zeros((3, hpad + cpad), jnp.float32)
        p1 = p1.at[0, :hid].set(m['b1']).at[0, hpad:hpad + cout].set(m['bs'])
        p1 = p1.at[1, :hid].set(m['g1']).at[1, hpad:hpad + cout].set(m['gs'])
        p1 = p1.at[2, :hid].set(m['be1']).at[2, hpad:hpad + cout].set(m['bes'])
    else:
        wcat = _pad2(m['w1'], cinp, hpad, bf)
        p1 = jnp.zeros((3, hpad), jnp.float32)
        p1 = p1.at[0, :hid].set(m['b1']).at[1, :hid].set(m['g1']).at[2, :hid].set(m['be1'])

    w2 = _pad2(m['w2'], hpad, cpad, bf)
    p2 = jnp.zeros((4, cpad), jnp.float32)
    p2 = p2.at[0, :cout].set(m['b2']).at[1, :cout].set(m['g2']).at[2, :cout].set(m['be2'])
    p2 = p2.at[3, 0].set(raw['bf'][0])
    wf = jnp.zeros((cpad, LANE), bf).at[:cout, 0].set(raw['wf'][:, 0].astype(bf))

    dev['mlp'] = {'wcat': wcat, 'p1': p1, 'w2': w2, 'p2': p2, 'wf': wf,
                  'cinp': cinp, 'hidden': hid, 'cout': cout,
                  'linear_shortcut': linear_shortcut}
    return dev


# ----------------------------------------------------------------------------
# full forward (mirrors TCN.forward, inference mode)
# ----------------------------------------------------------------------------
def tcn_forward(x_acc, x_att, dev):
    bf = jnp.bfloat16
    E = dev['embed_size']
    # TODO(synk): embedding gathers are data-dependent HBM gathers left to XLA;
    # all TemporalBlocks (incl. the mean over time) and the MLP decoder + final
    # head run inside Pallas kernels.
    ex = dev['enc_x'][x_acc[:, 0]]             # (B, L, E)
    ey = dev['enc_y'][x_acc[:, 1]]             # (B, L, E)
    B, L, _ = ex.shape

    cin0p = dev['levels'][0]['cinp']
    a = jnp.zeros((B, L, cin0p), bf)           # channel pad once, before the loop
    a = a.at[:, :, :E].set(ex.astype(bf)).at[:, :, E:2 * E].set(ey.astype(bf))

    x_mean_p = None
    for lvl in dev['levels']:
        a, x_mean_p = _temporal_block(a, lvl)  # mean folded into the block kernel

    z = (dev['enc_z1'][x_att[:, 0]] + dev['enc_z2'][x_att[:, 1]]
         + dev['enc_z3'][x_att[:, 2]])         # (B, E) f32
    mp = dev['mlp']
    ee = x_mean_p.at[:, :E].add(z).astype(bf)  # padded lanes stay exactly 0

    outputs, final = _mlp_decoder(ee, mp)
    return final, outputs, x_mean_p[:, :E]


# ----------------------------------------------------------------------------
# pure-JAX reference (same bf16 operand quantisation as the kernels)
# ----------------------------------------------------------------------------
def tcn_reference(x_acc, x_att, raw):
    bf, f32 = jnp.bfloat16, jnp.float32
    ex = raw['enc_x'][x_acc[:, 0]]
    ey = raw['enc_y'][x_acc[:, 1]]
    a = jnp.concatenate([ex, ey], axis=-1).astype(bf)
    B, L, _ = a.shape

    out_f32 = None
    for lvl in raw['levels']:
        d = lvl['dilation']
        K = lvl['w1'].shape[0]

        def shiftby(t, s):
            if s == 0:
                return t
            return jnp.pad(t, ((0, 0), (s, 0), (0, 0)))[:, :L, :]

        def conv(v, w, b):
            acc = b
            for k in range(K):
                acc = acc + jnp.dot(shiftby(v, (K - 1 - k) * d), w[k].astype(bf),
                                    preferred_element_type=f32)
            return acc

        h = jnp.maximum(conv(a, lvl['w1'], lvl['b1']), 0.0).astype(bf)
        y = jnp.maximum(conv(h, lvl['w2'], lvl['b2']), 0.0)
        if lvl['wd'] is None:
            res = a.astype(f32)
        else:
            res = jnp.dot(a, lvl['wd'].astype(bf), preferred_element_type=f32) + lvl['bd']
        out_f32 = jnp.maximum(y + res, 0.0)
        a = out_f32.astype(bf)

    x_mean = jnp.mean(out_f32, axis=1)
    z = (raw['enc_z1'][x_att[:, 0]] + raw['enc_z2'][x_att[:, 1]]
         + raw['enc_z3'][x_att[:, 2]])
    ee = (x_mean + z).astype(bf)

    m = raw['mlp']
    h = _layernorm(jnp.dot(ee, m['w1'].astype(bf), preferred_element_type=f32) + m['b1'],
                   m['g1'], m['be1'], m['hidden'])
    h = jnp.maximum(h, 0.0)
    o = _layernorm(jnp.dot(h.astype(bf), m['w2'].astype(bf), preferred_element_type=f32) + m['b2'],
                   m['g2'], m['be2'], m['cout'])
    if m['ws'] is None:
        s = ee.astype(f32)
    else:
        s = _layernorm(jnp.dot(ee, m['ws'].astype(bf), preferred_element_type=f32) + m['bs'],
                       m['gs'], m['bes'], m['cout'])
    outputs = jnp.maximum(o + s, 0.0)
    final = jnp.dot(outputs.astype(bf), raw['wf'].astype(bf),
                    preferred_element_type=f32)[:, 0] + raw['bf'][0]
    return final, outputs, x_mean


# ----------------------------------------------------------------------------
if __name__ == "__main__":
    key = jax.random.PRNGKey(0)
    kp, ka, kb = jax.random.split(key, 3)

    # Small TCN: embed_size=8, temporal channels (16, 8) (last == embed_size as
    # TCN.forward requires), kernel_size=2, batch=4, sequence length=16.
    embed_size, num_channels, ksz = 8, (16, 8), 2
    B, L = 4, 16

    raw = init_tcn_params(kp, embed_size, num_channels, kernel_size=ksz)
    dev = prepare_device_params(raw)

    x_acc = jax.random.randint(ka, (B, 2, L), 0, 200, dtype=jnp.int32)
    k1, k2, k3 = jax.random.split(kb, 3)
    x_att = jnp.stack([jax.random.randint(k1, (B,), 0, 2, dtype=jnp.int32),
                       jax.random.randint(k2, (B,), 0, 2, dtype=jnp.int32),
                       jax.random.randint(k3, (B,), 0, 3, dtype=jnp.int32)], axis=1)

    final, outputs, x_mean = tcn_forward(x_acc, x_att, dev)
    final, outputs, x_mean = jax.block_until_ready((final, outputs, x_mean))

    rf, ro, rx = tcn_reference(x_acc, x_att, raw)
    assert final.shape == (B,) and outputs.shape == (B, 16) and x_mean.shape == (B, embed_size)
    assert jnp.allclose(x_mean, rx, atol=2e-2, rtol=2e-2), "tcn mean mismatch"
    assert jnp.allclose(outputs, ro, atol=2e-2, rtol=2e-2), "decoder outputs mismatch"
    assert jnp.allclose(final, rf, atol=2e-2, rtol=2e-2), "final head mismatch"

    print("KERNEL_OK")
</pallas_src>

<mosaic_0001>
module attributes {stable_mosaic.version = 11 : i64} {
  func.func @_temporal_block_kernel(%arg0: i32, %arg1: memref<1x16x128xbf16, #tpu.memory_space<vmem>>, %arg2: memref<128x256xbf16, #tpu.memory_space<vmem>>, %arg3: memref<128x256xbf16, #tpu.memory_space<vmem>>, %arg4: memref<3x128xf32, #tpu.memory_space<vmem>>, %arg5: memref<1x16x128xbf16, #tpu.memory_space<vmem>>, %arg6: memref<1x8x128xf32, #tpu.memory_space<vmem>>) attributes {dimension_semantics = [#tpu.dimension_semantics<parallel>], iteration_bounds = array<i64: 4>, scalar_prefetch = 0 : i64, scratch_operands = 0 : i64, tpu.core_type = #tpu.core_type<tc>, window_params = [{transform_indices = @transform_0, window_bounds = array<i64: 1, 16, 128>}, {pipeline_mode = #tpu.pipeline_mode<synchronous>, transform_indices = @transform_1, window_bounds = array<i64: 128, 256>}, {pipeline_mode = #tpu.pipeline_mode<synchronous>, transform_indices = @transform_2, window_bounds = array<i64: 128, 256>}, {pipeline_mode = #tpu.pipeline_mode<synchronous>, transform_indices = @transform_3, window_bounds = array<i64: 3, 128>}, {transform_indices = @transform_4, window_bounds = array<i64: 1, 16, 128>}, {transform_indices = @transform_5, window_bounds = array<i64: 1, 8, 128>}]} {
    %c0 = arith.constant 0 : index
    %c0_0 = arith.constant 0 : index
    %c0_1 = arith.constant 0 : index
    %0 = vector.load %arg1[%c0, %c0_0, %c0_1] : memref<1x16x128xbf16, #tpu.memory_space<vmem>>, vector<1x16x128xbf16>
    %1 = vector.shape_cast %0 : vector<1x16x128xbf16> to vector<16x128xbf16>
    %c0_2 = arith.constant 0 : index
    %c0_3 = arith.constant 0 : index
    %2 = vector.load %arg4[%c0_2, %c0_3] : memref<3x128xf32, #tpu.memory_space<vmem>>, vector<3x128xf32>
    %c0_4 = arith.constant 0 : index
    %c0_5 = arith.constant 0 : index
    %3 = vector.load %arg2[%c0_4, %c0_5] : memref<128x256xbf16, #tpu.memory_space<vmem>>, vector<128x256xbf16>
    %cst = arith.constant dense<0.000000e+00> : vector<16x256xf32>
    %4 = tpu.matmul %1, %3, %cst {dimension_numbers = #tpu.dot_dimension_numbers<[1], [0], [0], [1], [0, 0, 1, 1], [], []>} : vector<16x128xbf16>, vector<128x256xbf16>, vector<16x256xf32> -> vector<16x256xf32>
    %5 = vector.extract_strided_slice %2 {offsets = [0, 0], sizes = [1, 128], strides = [1, 1]} : vector<3x128xf32> to vector<1x128xf32>
    %6 = vector.extract_strided_slice %4 {offsets = [0, 0], sizes = [16, 128], strides = [1, 1]} : vector<16x256xf32> to vector<16x128xf32>
    %cst_6 = arith.constant 0.000000e+00 : f32
    %7 = vector.broadcast %cst_6 : f32 to vector<1x128xf32>
    %8 = vector.extract_strided_slice %6 {offsets = [0, 0], sizes = [15, 128], strides = [1, 1]} : vector<16x128xf32> to vector<15x128xf32>
    %9 = tpu.concatenate %7, %8 in 0 : vector<1x128xf32>, vector<15x128xf32> -> vector<16x128xf32>
    %10 = vector.broadcast %5 : vector<1x128xf32> to vector<16x128xf32>
    %11 = arith.addf %10, %9 : vector<16x128xf32>
    %12 = vector.extract_strided_slice %4 {offsets = [0, 128], sizes = [16, 128], strides = [1, 1]} : vector<16x256xf32> to vector<16x128xf32>
    %13 = arith.addf %11, %12 : vector<16x128xf32>
    %cst_7 = arith.constant 0.000000e+00 : f32
    %14 = vector.broadcast %cst_7 : f32 to vector<16x128xf32>
    %15 = arith.maximumf %13, %14 : vector<16x128xf32>
    %16 = arith.truncf %15 : vector<16x128xf32> to vector<16x128xbf16>
    %c0_8 = arith.constant 0 : index
    %c0_9 = arith.constant 0 : index
    %17 = vector.load %arg3[%c0_8, %c0_9] : memref<128x256xbf16, #tpu.memory_space<vmem>>, vector<128x256xbf16>
    %cst_10 = arith.constant dense<0.000000e+00> : vector<16x256xf32>
    %18 = tpu.matmul %16, %17, %cst_10 {dimension_numbers = #tpu.dot_dimension_numbers<[1], [0], [0], [1], [0, 0, 1, 1], [], []>} : vector<16x128xbf16>, vector<128x256xbf16>, vector<16x256xf32> -> vector<16x256xf32>
    %19 = vector.extract_strided_slice %2 {offsets = [1, 0], sizes = [1, 128], strides = [1, 1]} : vector<3x128xf32> to vector<1x128xf32>
    %20 = vector.extract_strided_slice %18 {offsets = [0, 0], sizes = [16, 128], strides = [1, 1]} : vector<16x256xf32> to vector<16x128xf32>
    %cst_11 = arith.constant 0.000000e+00 : f32
    %21 = vector.broadcast %cst_11 : f32 to vector<1x128xf32>
    %22 = vector.extract_strided_slice %20 {offsets = [0, 0], sizes = [15, 128], strides = [1, 1]} : vector<16x128xf32> to vector<15x128xf32>
    %23 = tpu.concatenate %21, %22 in 0 : vector<1x128xf32>, vector<15x128xf32> -> vector<16x128xf32>
    %24 = vector.broadcast %19 : vector<1x128xf32> to vector<16x128xf32>
    %25 = arith.addf %24, %23 : vector<16x128xf32>
    %26 = vector.extract_strided_slice %18 {offsets = [0, 128], sizes = [16, 128], strides = [1, 1]} : vector<16x256xf32> to vector<16x128xf32>
    %27 = arith.addf %25, %26 : vector<16x128xf32>
    %cst_12 = arith.constant 0.000000e+00 : f32
    %28 = vector.broadcast %cst_12 : f32 to vector<16x128xf32>
    %29 = arith.maximumf %27, %28 : vector<16x128xf32>
    %30 = arith.extf %1 : vector<16x128xbf16> to vector<16x128xf32>
    %31 = arith.addf %29, %30 : vector<16x128xf32>
    %cst_13 = arith.constant 0.000000e+00 : f32
    %32 = vector.broadcast %cst_13 : f32 to vector<16x128xf32>
    %33 = arith.maximumf %31, %32 : vector<16x128xf32>
    %34 = arith.truncf %33 : vector<16x128xf32> to vector<16x128xbf16>
    %c0_14 = arith.constant 0 : index
    %c0_15 = arith.constant 0 : index
    %c0_16 = arith.constant 0 : index
    %35 = vector.load %arg5[%c0_14, %c0_15, %c0_16] : memref<1x16x128xbf16, #tpu.memory_space<vmem>>, vector<1x16x128xbf16>
    %36 = vector.shape_cast %35 : vector<1x16x128xbf16> to vector<16x128xbf16>
    %37 = vector.shape_cast %34 : vector<16x128xbf16> to vector<1x16x128xbf16>
    tpu.vector_store %arg5[%c0_14, %c0_15, %c0_16], %37 {strides = array<i32>} : memref<1x16x128xbf16, #tpu.memory_space<vmem>>, vector<1x16x128xbf16>,
    %cst_17 = arith.constant dense<0.000000e+00> : vector<128xf32>
    %38 = vector.multi_reduction <add>, %33, %cst_17 [0] : vector<16x128xf32> to vector<128xf32>
    %39 = vector.shape_cast %38 : vector<128xf32> to vector<1x128xf32>
    %cst_18 = arith.constant 6.250000e-02 : f32
    %40 = vector.broadcast %cst_18 : f32 to vector<1x128xf32>
    %41 = arith.mulf %39, %40 : vector<1x128xf32>
    %42 = vector.shape_cast %41 : vector<1x128xf32> to vector<1x128xf32>
    %43 = vector.broadcast %42 : vector<1x128xf32> to vector<8x128xf32>
    %c0_19 = arith.constant 0 : index
    %c0_20 = arith.constant 0 : index
    %c0_21 = arith.constant 0 : index
    %44 = vector.load %arg6[%c0_19, %c0_20, %c0_21] : memref<1x8x128xf32, #tpu.memory_space<vmem>>, vector<1x8x128xf32>
    %45 = vector.shape_cast %44 : vector<1x8x128xf32> to vector<8x128xf32>
    %46 = vector.shape_cast %43 : vector<8x128xf32> to vector<1x8x128xf32>
    tpu.vector_store %arg6[%c0_19, %c0_20, %c0_21], %46 {strides = array<i32>} : memref<1x8x128xf32, #tpu.memory_space<vmem>>, vector<1x8x128xf32>,
    return
  }
  func.func @transform_0(%arg0: i32) -> (i32, i32, i32) {
    %c0_i32 = arith.constant 0 : i32
    %c0_i32_0 = arith.constant 0 : i32
    %c0_i32_1 = arith.constant 0 : i32
    return %arg0, %c0_i32, %c0_i32_0 : i32, i32, i32
  }
  func.func @transform_1(%arg0: i32) -> (i32, i32) {
    %c0_i32 = arith.constant 0 : i32
    %c0_i32_0 = arith.constant 0 : i32
    %c0_i32_1 = arith.constant 0 : i32
    return %c0_i32, %c0_i32_0 : i32, i32
  }
  func.func @transform_2(%arg0: i32) -> (i32, i32) {
    %c0_i32 = arith.constant 0 : i32
    %c0_i32_0 = arith.constant 0 : i32
    %c0_i32_1 = arith.constant 0 : i32
    return %c0_i32, %c0_i32_0 : i32, i32
  }
  func.func @transform_3(%arg0: i32) -> (i32, i32) {
    %c0_i32 = arith.constant 0 : i32
    %c0_i32_0 = arith.constant 0 : i32
    %c0_i32_1 = arith.constant 0 : i32
    return %c0_i32, %c0_i32_0 : i32, i32
  }
  func.func @transform_4(%arg0: i32) -> (i32, i32, i32) {
    %c0_i32 = arith.constant 0 : i32
    %c0_i32_0 = arith.constant 0 : i32
    %c0_i32_1 = arith.constant 0 : i32
    return %arg0, %c0_i32, %c0_i32_0 : i32, i32, i32
  }
  func.func @transform_5(%arg0: i32) -> (i32, i32, i32) {
    %c0_i32 = arith.constant 0 : i32
    %c0_i32_0 = arith.constant 0 : i32
    %c0_i32_1 = arith.constant 0 : i32
    return %arg0, %c0_i32, %c0_i32_0 : i32, i32, i32
  }
}

</mosaic_0001>

<llo_original>
// kernel: tpu_custom_call.1
$region0: #{tpu_custom_call.1}
  #allocation0 [shape = 'u32[]', space=smem, size = 0x4, offset = 0x4, fixed_abs, tag = 'smem constant byte address 0x4 - core index']
  #allocation1 [shape = 'u32[144,128]{1,0:T(1,128)}', space=vmem, size = 0x12000, scoped, tag = 'internal scratch']
  %s0 = inlined_call_operand.hbm [shape: bf16[4,16,128], index: 0, kind: input, shape index: {}]
  %s1 = inlined_call_operand.hbm [shape: bf16[128,256], index: 1, kind: input, shape index: {}]
  %s2 = inlined_call_operand.hbm [shape: bf16[128,256], index: 2, kind: input, shape index: {}]
  %s3 = inlined_call_operand.vmem [shape: f32[3,128], index: 3, kind: input, shape index: {}]
  %s4 = inlined_call_operand.hbm [shape: bf16[4,16,128], index: 4, kind: output, shape index: {0}]
  %s5 = inlined_call_operand.hbm [shape: f32[4,8,128], index: 5, kind: output, shape index: {1}]
  %6 = xla_tuple %s4, %s5
  %s7 = sld [smem:[#allocation0]]
  $region69: #{tpu_custom_call.1} parent=0
    _
  %s9 = ssub.s32 1, %s7
  %s10 = scalar_select 0, %s9, %s7
  $region1: #{tpu_custom_call.1} parent=0
    #allocation2 [shape = 'u8[8192]{0}', space=vmem, size = 0x2000, scoped, tag = 'input window, operand 0']
    #allocation3 [shape = 's32[2]{0}', space=sflag, size = 0x8, scoped, tag = 'scoped memory for tpu_custom_call.1']
    #allocation4 [shape = 's32[2]{0}', space=sflag, size = 0x8, scoped, tag = 'scoped memory for tpu_custom_call.1']
    #allocation5 [shape = 'u8[65536]{0}', space=vmem, size = 0x10000, scoped, tag = 'input window, operand 1, single buffered']
    #allocation6 [shape = 's32[1]{0}', space=sflag, size = 0x4, scoped, tag = 'scoped memory for tpu_custom_call.1']
    #allocation7 [shape = 'u8[65536]{0}', space=vmem, size = 0x10000, scoped, tag = 'input window, operand 2, single buffered']
    #allocation8 [shape = 'u8[8192]{0}', space=vmem, size = 0x2000, scoped, tag = 'output window, operand 0']
    #allocation9 [shape = 'u8[8192]{0}', space=vmem, size = 0x2000, scoped, tag = 'output window, operand 1']
    #allocation10 [shape = 's32[2]{0}', space=sflag, size = 0x8, scoped, tag = 'scoped memory for tpu_custom_call.1']
    %11 = vsyncpa [#allocation3], 0
    %s12 = scalar_lea.sflag [#allocation3], 1
    %13 = vsyncpa %s12, 0
    %14 = vsyncpa [#allocation6], 0
    %15 = vsyncpa [#allocation4], 0
    %s16 = scalar_lea.sflag [#allocation4], 1
    %17 = vsyncpa %s16, 0
    %18 = vsyncpa [#allocation10], 0
    %s19 = scalar_lea.sflag [#allocation10], 1
    %20 = vsyncpa %s19, 0
    loop: start=0, step=1, limit=6
    $region2: #{tpu_custom_call.1} parent=1 // loop_pre_header
      _
    $region3: #{tpu_custom_call.1} parent=1 // loop_header
      %s22 = sphi 0, %s26
      %p23 = scmp.ge.s32.totalorder %s22, 6
      %s32 = sphi 0, %s34
      %s35 = sphi 0, %s32
      %s36 = sphi 0, %s35
      %s52 = sphi 0, %s36
      %s56 = sphi 0, %s56
      %s58 = sphi 0, %s56
      %s59 = sphi 0, %s58
      %s73 = sphi 0, %s59
      %s77 = sphi 0, %s77
      %s79 = sphi 0, %s77
      %s80 = sphi 0, %s79
      %s94 = sphi 0, %s80
      %s98 = sphi 0, %s98
      %s100 = sphi 0, %s98
      %s101 = sphi 0, %s100
      %s115 = sphi 0, %s101
      %s121 = sphi 0, %s123
      %s124 = sphi 0, %s121
      %s125 = sphi 0, %s124
      %s141 = sphi 0, %s125
      %s147 = sphi 0, %s149
      %s150 = sphi 0, %s147
      %s151 = sphi 0, %s150
      %s167 = sphi 0, %s151
    $region4: #{tpu_custom_call.1} parent=1 // loop_header_branch
      %25 = sbr.rel (%p23) target = $region8
    $region5: #{tpu_custom_call.1} parent=1 // loop_body
      %s27 = ssub.s32 %s22, 1
      %s28 = ssub.s32 %s22, 2
      %s29 = sadd.s32 %s22, 1
      %s30 = ssub.s32 %s22, %s29
      %p31 = scmp.eq.s32.totalorder %s30, 0
      %s33 = sadd.s32 %s32, 1
      %s34 = scalar_select %p31, %s32, %s33
      %p37 = pneg %p31
      %p38 = scmp.eq.s32.totalorder %s22, 3
      %p39 = por %p37, %p38
      %p40 = scmp.ne.s32.totalorder %s32, %s35
      %p41 = scmp.eq.s32.totalorder %s22, 0
      %p42 = por %p40, %p41
      %p43 = scmp.ne.s32.totalorder %s32, %s35
      %p44 = scmp.eq.s32.totalorder %s27, 3
      %p45 = por %p43, %p44
      %p46 = scmp.ne.s32.totalorder %s35, %s36
      %p47 = scmp.eq.s32.totalorder %s27, 0
      %p48 = por %p46, %p47
      %p49 = scmp.ne.s32.totalorder %s35, %s36
      %p50 = scmp.eq.s32.totalorder %s28, 3
      %p51 = por %p49, %p50
      %p53 = scmp.ne.s32.totalorder %s36, %s52
      %p54 = scmp.eq.s32.totalorder %s28, 0
      %p55 = por %p53, %p54
      %s57 = sadd.s32 %s56, 1
      %p60 = scmp.eq.s32.totalorder %s22, 3
      %p61 = scmp.ne.s32.totalorder %s56, %s58
      %p62 = scmp.eq.s32.totalorder %s22, 0
      %p63 = por %p61, %p62
      %p64 = scmp.ne.s32.totalorder %s56, %s58
      %p65 = scmp.eq.s32.totalorder %s27, 3
      %p66 = por %p64, %p65
      %p67 = scmp.ne.s32.totalorder %s58, %s59
      %p68 = scmp.eq.s32.totalorder %s27, 0
      %p69 = por %p67, %p68
      %p70 = scmp.ne.s32.totalorder %s58, %s59
      %p71 = scmp.eq.s32.totalorder %s28, 3
      %p72 = por %p70, %p71
      %p74 = scmp.ne.s32.totalorder %s59, %s73
      %p75 = scmp.eq.s32.totalorder %s28, 0
      %p76 = por %p74, %p75
      %s78 = sadd.s32 %s77, 1
      %p81 = scmp.eq.s32.totalorder %s22, 3
      %p82 = scmp.ne.s32.totalorder %s77, %s79
      %p83 = scmp.eq.s32.totalorder %s22, 0
      %p84 = por %p82, %p83
      %p85 = scmp.ne.s32.totalorder %s77, %s79
      %p86 = scmp.eq.s32.totalorder %s27, 3
      %p87 = por %p85, %p86
      %p88 = scmp.ne.s32.totalorder %s79, %s80
      %p89 = scmp.eq.s32.totalorder %s27, 0
      %p90 = por %p88, %p89
      %p91 = scmp.ne.s32.totalorder %s79, %s80
      %p92 = scmp.eq.s32.totalorder %s28, 3
      %p93 = por %p91, %p92
      %p95 = scmp.ne.s32.totalorder %s80, %s94
      %p96 = scmp.eq.s32.totalorder %s28, 0
      %p97 = por %p95, %p96
      %s99 = sadd.s32 %s98, 1
      %p102 = scmp.eq.s32.totalorder %s22, 3
      %p103 = scmp.ne.s32.totalorder %s98, %s100
      %p104 = scmp.eq.s32.totalorder %s22, 0
      %p105 = por %p103, %p104
      %p106 = scmp.ne.s32.totalorder %s98, %s100
      %p107 = scmp.eq.s32.totalorder %s27, 3
      %p108 = por %p106, %p107
      %p109 = scmp.ne.s32.totalorder %s100, %s101
      %p110 = scmp.eq.s32.totalorder %s27, 0
      %p111 = por %p109, %p110
      %p112 = scmp.ne.s32.totalorder %s100, %s101
      %p113 = scmp.eq.s32.totalorder %s28, 3
      %p114 = por %p112, %p113
      %p116 = scmp.ne.s32.totalorder %s101, %s115
      %p117 = scmp.eq.s32.totalorder %s28, 0
      %p118 = por %p116, %p117
      %s119 = ssub.s32 %s22, %s29
      %p120 = scmp.eq.s32.totalorder %s119, 0
      %s122 = sadd.s32 %s121, 1
      %s123 = scalar_select %p120, %s121, %s122
      %p126 = pneg %p120
      %p127 = scmp.eq.s32.totalorder %s22, 3
      %p128 = por %p126, %p127
      %p129 = scmp.ne.s32.totalorder %s121, %s124
      %p130 = scmp.eq.s32.totalorder %s22, 0
      %p131 = por %p129, %p130
      %p132 = scmp.ne.s32.totalorder %s121, %s124
      %p133 = scmp.eq.s32.totalorder %s27, 3
      %p134 = por %p132, %p133
      %p135 = scmp.ne.s32.totalorder %s124, %s125
      %p136 = scmp.eq.s32.totalorder %s27, 0
      %p137 = por %p135, %p136
      %p138 = scmp.ne.s32.totalorder %s124, %s125
      %p139 = scmp.eq.s32.totalorder %s28, 3
      %p140 = por %p138, %p139
      %p142 = scmp.ne.s32.totalorder %s125, %s141
      %p143 = scmp.eq.s32.totalorder %s28, 0
      %p144 = por %p142, %p143
      %s145 = ssub.s32 %s22, %s29
      %p146 = scmp.eq.s32.totalorder %s145, 0
      %s148 = sadd.s32 %s147, 1
      %s149 = scalar_select %p146, %s147, %s148
      %p152 = pneg %p146
      %p153 = scmp.eq.s32.totalorder %s22, 3
      %p154 = por %p152, %p153
      %p155 = scmp.ne.s32.totalorder %s147, %s150
      %p156 = scmp.eq.s32.totalorder %s22, 0
      %p157 = por %p155, %p156
      %p158 = scmp.ne.s32.totalorder %s147, %s150
      %p159 = scmp.eq.s32.totalorder %s27, 3
      %p160 = por %p158, %p159
      %p161 = scmp.ne.s32.totalorder %s150, %s151
      %p162 = scmp.eq.s32.totalorder %s27, 0
      %p163 = por %p161, %p162
      %p164 = scmp.ne.s32.totalorder %s150, %s151
      %p165 = scmp.eq.s32.totalorder %s28, 3
      %p166 = por %p164, %p165
      %p168 = scmp.ne.s32.totalorder %s151, %s167
      %p169 = scmp.eq.s32.totalorder %s28, 0
      %p170 = por %p168, %p169
      %p171 = scmp.le.s32.totalorder 1, %s22
      %p172 = scmp.lt.s32.totalorder %s22, 5
      %p173 = pnand %p171, %p172
      %p174 = pneg %p173
      // Predicated region
      $region9: #{tpu_custom_call.1} parent=5 // pred_check
        _
      $region10: #{tpu_custom_call.1} parent=5 // pred_check_branch
        %176 = sbr.rel (%p173) target = $region12
      $region11: #{tpu_custom_call.1} parent=5 // pred_region
        %s177 = ssub.s32 %s22, 1
        // Predicated region
        $region13: #{tpu_custom_call.1} parent=11 // pred_check
          %p178 = pneg %p69
        $region14: #{tpu_custom_call.1} parent=11 // pred_check_branch
          %180 = sbr.rel (%p178) target = $region16
        $region15: #{tpu_custom_call.1} parent=11 // pred_region
          %s182 = ssub.s32 2048, 2048
          %183 = vsyncadd [#allocation6], %s182
          %s184 = sshll.u32 [#allocation5], 4
          %s185 = int_to_ptr.vmem [resolvable:$true] %s184
          %190 = dma.hbm_to_vmem [thread:$0]  %s1, 2048, %s185, [#allocation6], 128, 128, 8
        $region16: #{tpu_custom_call.1} parent=11 // pred_fallthru
          _
        // Predicated region
        $region17: #{tpu_custom_call.1} parent=11 // pred_check
          %p191 = pneg %p90
        $region18: #{tpu_custom_call.1} parent=11 // pred_check_branch
          %193 = sbr.rel (%p191) target = $region20
        $region19: #{tpu_custom_call.1} parent=11 // pred_region
          %s195 = ssub.s32 2048, 2048
          %196 = vsyncadd [#allocation6], %s195
          %s197 = sshll.u32 [#allocation7], 4
          %s198 = int_to_ptr.vmem [resolvable:$true] %s197
          %203 = dma.hbm_to_vmem [thread:$0]  %s2, 2048, %s198, [#allocation6], 128, 128, 8
        $region20: #{tpu_custom_call.1} parent=11 // pred_fallthru
          _
        // Predicated region
        $region21: #{tpu_custom_call.1} parent=11 // pred_check
          %p204 = pneg %p111
        $region22: #{tpu_custom_call.1} parent=11 // pred_check_branch
          %206 = sbr.rel (%p204) target = $region24
        $region23: #{tpu_custom_call.1} parent=11 // pred_region
          _
        $region24: #{tpu_custom_call.1} parent=11 // pred_fallthru
          _
      $region12: #{tpu_custom_call.1} parent=5 // pred_fallthru
        _
      %p207 = scmp.lt.s32.totalorder %s22, 4
      // Predicated region
      $region25: #{tpu_custom_call.1} parent=5 // pred_check
        %p208 = pneg %p207
      $region26: #{tpu_custom_call.1} parent=5 // pred_check_branch
        %210 = sbr.rel (%p208) target = $region28
      $region27: #{tpu_custom_call.1} parent=5 // pred_region
        // Predicated region
        $region29: #{tpu_custom_call.1} parent=27 // pred_check
          %p211 = pneg %p42
        $region30: #{tpu_custom_call.1} parent=27 // pred_check_branch
          %213 = sbr.rel (%p211) target = $region32
        $region31: #{tpu_custom_call.1} parent=27 // pred_region
          %s214 = sand.u32 %s32, 1
          %s215 = scalar_lea.sflag [#allocation3], %s214
          %s216 = sand.u32 %s32, 1
          %s217 = smul.addr %s216, 8
          %s218 = scalar_lea.vmem [#allocation2], %s217
          %s220 = ssub.s32 128, 128
          %221 = vsyncadd %s215, %s220
          %s222 = smul.addr %s22, 2
          %s223 = smul.addr %s222, 64
          %s224 = scalar_lea.hbm %s0, %s223
          %s225 = sshll.u32 %s218, 4
          %s226 = int_to_ptr.vmem [resolvable:$true] %s225
          %231 = dma.hbm_to_vmem [thread:$0]  %s224, 128, %s226, %s215, 64, 64, 4
        $region32: #{tpu_custom_call.1} parent=27 // pred_fallthru
          _
      $region28: #{tpu_custom_call.1} parent=5 // pred_fallthru
        _
      %p232 = scmp.le.s32.totalorder 1, %s22
      %p233 = scmp.lt.s32.totalorder %s22, 5
      %p234 = pnand %p232, %p233
      %p235 = pneg %p234
      // Predicated region
      $region33: #{tpu_custom_call.1} parent=5 // pred_check
        _
      $region34: #{tpu_custom_call.1} parent=5 // pred_check_branch
        %237 = sbr.rel (%p234) target = $region36
      $region35: #{tpu_custom_call.1} parent=5 // pred_region
        %s238 = ssub.s32 %s22, 1
        %s239 = sand.u32 %s35, 1
        %s240 = scalar_lea.sflag [#allocation3], %s239
        %s241 = sand.u32 %s35, 1
        %s242 = smul.addr %s241, 8
        %s243 = scalar_lea.vmem [#allocation2], %s242
        // Predicated region
        $region37: #{tpu_custom_call.1} parent=35 // pred_check
          %p244 = pneg %p48
        $region38: #{tpu_custom_call.1} parent=35 // pred_check_branch
          %246 = sbr.rel (%p244) target = $region40
        $region39: #{tpu_custom_call.1} parent=35 // pred_region
          %247 = dma.done %s240, 128
        $region40: #{tpu_custom_call.1} parent=35 // pred_fallthru
          _
        // Predicated region
        $region41: #{tpu_custom_call.1} parent=35 // pred_check
          %p248 = pneg %p69
        $region42: #{tpu_custom_call.1} parent=35 // pred_check_branch
          %250 = sbr.rel (%p248) target = $region44
        $region43: #{tpu_custom_call.1} parent=35 // pred_region
          %251 = dma.done [#allocation6], 2048
        $region44: #{tpu_custom_call.1} parent=35 // pred_fallthru
          _
        // Predicated region
        $region45: #{tpu_custom_call.1} parent=35 // pred_check
          %p252 = pneg %p90
        $region46: #{tpu_custom_call.1} parent=35 // pred_check_branch
          %254 = sbr.rel (%p252) target = $region48
        $region47: #{tpu_custom_call.1} parent=35 // pred_region
          %255 = dma.done [#allocation6], 2048
        $region48: #{tpu_custom_call.1} parent=35 // pred_fallthru
          _
        %s256 = sand.u32 %s35, 1
        %s257 = scalar_lea.sflag [#allocation3], %s256
        %s258 = sand.u32 %s35, 1
        %s259 = smul.addr %s258, 8
        %s260 = scalar_lea.vmem [#allocation2], %s259
        %p261 = pneg %p48
        %p262 = pneg %p45
        %p263 = pneg %p69
        %p264 = pneg %p66
        %p265 = pneg %p90
        %p266 = pneg %p87
        %p267 = pneg %p111
        %p268 = pneg %p108
        %p269 = pneg %p137
        %p270 = pneg %p134
        %s271 = sand.u32 %s124, 1
        %s272 = scalar_lea.sflag [#allocation4], %s271
        %s273 = sand.u32 %s124, 1
        %s274 = smul.addr %s273, 8
        %s275 = scalar_lea.vmem [#allocation8], %s274
        %p276 = pneg %p163
        %p277 = pneg %p160
        %s278 = sand.u32 %s150, 1
        %s279 = scalar_lea.sflag [#allocation10], %s278
        %s280 = sand.u32 %s150, 1
        %s281 = smul.addr %s280, 8
        %s282 = scalar_lea.vmem [#allocation9], %s281
        %v284 = vld [vmem:[%s243] sm:$0xf]
        %v285 = vld [vmem:[%s243 + $0x4] sm:$0xf]
        %v286 = vld [vmem:[%s3] sm:$0x7]
        %v287 = vld [vmem:[#allocation5] sm:$0xff]
        %v288 = vld [vmem:[#allocation5 + $0x8] sm:$0xff]
        %v289 = vld [vmem:[#allocation5 + $0x10] sm:$0xff]
        %v290 = vld [vmem:[#allocation5 + $0x18] sm:$0xff]
        %v291 = vld [vmem:[#allocation5 + $0x20] sm:$0xff]
        %v292 = vld [vmem:[#allocation5 + $0x28] sm:$0xff]
        %v293 = vld [vmem:[#allocation5 + $0x30] sm:$0xff]
        %v294 = vld [vmem:[#allocation5 + $0x38] sm:$0xff]
        %v295 = vld [vmem:[#allocation5 + $0x40] sm:$0xff]
        %v296 = vld [vmem:[#allocation5 + $0x48] sm:$0xff]
        %v297 = vld [vmem:[#allocation5 + $0x50] sm:$0xff]
        %v298 = vld [vmem:[#allocation5 + $0x58] sm:$0xff]
        %v299 = vld [vmem:[#allocation5 + $0x60] sm:$0xff]
        %v300 = vld [vmem:[#allocation5 + $0x68] sm:$0xff]
        %v301 = vld [vmem:[#allocation5 + $0x70] sm:$0xff]
        %v302 = vld [vmem:[#allocation5 + $0x78] sm:$0xff]
        %v305 = vunpack.c.l.b16 %v284
        %v306 = vunpack.c.l.b16 %v285
        %v307 = vpack.c.b16 %v306, %v305
        %v325 = vunpack.c.l.b16 %v287
        %v326 = vunpack.c.h.b16 %v287
        %v327 = vunpack.c.l.b16 %v288
        %v328 = vunpack.c.h.b16 %v288
        %v329 = vunpack.c.l.b16 %v289
        %v330 = vunpack.c.h.b16 %v289
        %v331 = vunpack.c.l.b16 %v290
        %v332 = vunpack.c.h.b16 %v290
        %v333 = vunpack.c.l.b16 %v291
        %v334 = vunpack.c.h.b16 %v291
        %v335 = vunpack.c.l.b16 %v292
        %v336 = vunpack.c.h.b16 %v292
        %v337 = vunpack.c.l.b16 %v293
        %v338 = vunpack.c.h.b16 %v293
        %v339 = vunpack.c.l.b16 %v294
        %v340 = vunpack.c.h.b16 %v294
        %v341 = vunpack.c.l.b16 %v295
        %v342 = vunpack.c.h.b16 %v295
        %v343 = vunpack.c.l.b16 %v296
        %v344 = vunpack.c.h.b16 %v296
        %v345 = vunpack.c.l.b16 %v297
        %v346 = vunpack.c.h.b16 %v297
        %v347 = vunpack.c.l.b16 %v298
        %v348 = vunpack.c.h.b16 %v298
        %v349 = vunpack.c.l.b16 %v299
        %v350 = vunpack.c.h.b16 %v299
        %v351 = vunpack.c.l.b16 %v300
        %v352 = vunpack.c.h.b16 %v300
        %v353 = vunpack.c.l.b16 %v301
        %v354 = vunpack.c.h.b16 %v301
        %v355 = vunpack.c.l.b16 %v302
        %v356 = vunpack.c.h.b16 %v302
        %v357 = vpack.c.b16 %v327, %v325
        %v358 = vpack.c.b16 %v328, %v326
        %v359 = vpack.c.b16 %v331, %v329
        %v360 = vpack.c.b16 %v332, %v330
        %v361 = vpack.c.b16 %v335, %v333
        %v362 = vpack.c.b16 %v336, %v334
        %v363 = vpack.c.b16 %v339, %v337
        %v364 = vpack.c.b16 %v340, %v338
        %v365 = vpack.c.b16 %v343, %v341
        %v366 = vpack.c.b16 %v344, %v342
        %v367 = vpack.c.b16 %v347, %v345
        %v368 = vpack.c.b16 %v348, %v346
        %v369 = vpack.c.b16 %v351, %v349
        %v370 = vpack.c.b16 %v352, %v350
        %v371 = vpack.c.b16 %v355, %v353
        %v372 = vpack.c.b16 %v356, %v354
        %389 = vmatprep.subr.bf16.mxu0 %v372
        %390 = vmatpush1.bf16.msra.mxu0 %v371
        %391 = vmatprep.subr.bf16.mxu0 %v370
        %392 = vmatpush1.bf16.msra.mxu0 %v369
        %393 = vmatprep.subr.bf16.mxu0 %v368
        %394 = vmatpush1.bf16.msra.mxu0 %v367
        %395 = vmatprep.subr.bf16.mxu0 %v366
        %396 = vmatpush1.bf16.msra.mxu0 %v365
        %397 = vmatprep.subr.bf16.mxu0 %v364
        %398 = vmatpush1.bf16.msra.mxu0 %v363
        %399 = vmatprep.subr.bf16.mxu0 %v362
        %400 = vmatpush1.bf16.msra.mxu0 %v361
        %401 = vmatprep.subr.bf16.mxu0 %v360
        %402 = vmatpush1.bf16.msra.mxu0 %v359
        %403 = vmatprep.subr.bf16.mxu0 %v358
        %404 = vmatpush1.bf16.msra.mxu0 %v357
        %405 = vmatprep.subr.bf16.mxu0 0
        %406 = vmatpush2.bf16.msra.mxu0 0
        %407 = vmatprep.subr.bf16.mxu0 0
        %408 = vmatpush2.bf16.msra.mxu0 0
        %409 = vmatprep.subr.bf16.mxu0 0
        %410 = vmatpush2.bf16.msra.mxu0 0
        %411 = vmatprep.subr.bf16.mxu0 0
        %412 = vmatpush2.bf16.msra.mxu0 0
        %413 = vmatprep.subr.bf16.mxu0 0
        %414 = vmatpush2.bf16.msra.mxu0 0
        %415 = vmatprep.subr.bf16.mxu0 0
        %416 = vmatpush2.bf16.msra.mxu0 0
        %417 = vmatprep.subr.bf16.mxu0 0
        %418 = vmatpush2.bf16.msra.mxu0 0
        %419 = vmatprep.subr.bf16.mxu0 0
        %420 = vmatpush2.bf16.msra.mxu0 0
        %421 = vmatprep.mubr.bf16.mxu0 0
        %422 = vmatmul.mubr.bf16.gmra.mxu0 %v307
        %v423 = vpop.f32.mrf.mxu0
        %v424 = vadd.f32 0.0, %v423
        %v425 = vpop.f32.mrf.mxu0
        %v426 = vadd.f32 0.0, %v425
        %v427 = vpop.f32.mrf.mxu0
        %v428 = vadd.f32 0.0, %v427
        %v429 = vpop.f32.mrf.mxu0
        %v430 = vadd.f32 0.0, %v429
        %431 = vdwg.mxu0
        %vm434 = vcmask 1040384
        %v435 = vrot.slane %v424, 7
        %v436 = vrot.slane %v428, 7
        %v437 = vsel %vm434, %v435, %v436
        %v440 = vsel %vm434, 0.0, %v435
        %v441 = vlaneseq
        %v442 = vshrl.u32 %v441, 7
        %v443 = vsub.s32 0, %v442
        %v444 = vrot.slane %v286, %v443
        %v445 = vadd.f32 %v444, %v440
        %v446 = vadd.f32 %v444, %v437
        %v447 = vadd.f32 %v445, %v426
        %v448 = vadd.f32 %v446, %v430
        %v449 = vmax.f32 %v447, 0.0
        %v450 = vmax.f32 %v448, 0.0
        %v451 = vpack.c.bf16 %v450, %v449
        %v452 = vld [vmem:[#allocation7] sm:$0xff]
        %v453 = vld [vmem:[#allocation7 + $0x8] sm:$0xff]
        %v454 = vld [vmem:[#allocation7 + $0x10] sm:$0xff]
        %v455 = vld [vmem:[#allocation7 + $0x18] sm:$0xff]
        %v456 = vld [vmem:[#allocation7 + $0x20] sm:$0xff]
        %v457 = vld [vmem:[#allocation7 + $0x28] sm:$0xff]
        %v458 = vld [vmem:[#allocation7 + $0x30] sm:$0xff]
        %v459 = vld [vmem:[#allocation7 + $0x38] sm:$0xff]
        %v460 = vld [vmem:[#allocation7 + $0x40] sm:$0xff]
        %v461 = vld [vmem:[#allocation7 + $0x48] sm:$0xff]
        %v462 = vld [vmem:[#allocation7 + $0x50] sm:$0xff]
        %v463 = vld [vmem:[#allocation7 + $0x58] sm:$0xff]
        %v464 = vld [vmem:[#allocation7 + $0x60] sm:$0xff]
        %v465 = vld [vmem:[#allocation7 + $0x68] sm:$0xff]
        %v466 = vld [vmem:[#allocation7 + $0x70] sm:$0xff]
        %v467 = vld [vmem:[#allocation7 + $0x78] sm:$0xff]
        %v484 = vunpack.c.l.b16 %v452
        %v485 = vunpack.c.h.b16 %v452
        %v486 = vunpack.c.l.b16 %v453
        %v487 = vunpack.c.h.b16 %v453
        %v488 = vunpack.c.l.b16 %v454
        %v489 = vunpack.c.h.b16 %v454
        %v490 = vunpack.c.l.b16 %v455
        %v491 = vunpack.c.h.b16 %v455
        %v492 = vunpack.c.l.b16 %v456
        %v493 = vunpack.c.h.b16 %v456
        %v494 = vunpack.c.l.b16 %v457
        %v495 = vunpack.c.h.b16 %v457
        %v496 = vunpack.c.l.b16 %v458
        %v497 = vunpack.c.h.b16 %v458
        %v498 = vunpack.c.l.b16 %v459
        %v499 = vunpack.c.h.b16 %v459
        %v500 = vunpack.c.l.b16 %v460
        %v501 = vunpack.c.h.b16 %v460
        %v502 = vunpack.c.l.b16 %v461
        %v503 = vunpack.c.h.b16 %v461
        %v504 = vunpack.c.l.b16 %v462
        %v505 = vunpack.c.h.b16 %v462
        %v506 = vunpack.c.l.b16 %v463
        %v507 = vunpack.c.h.b16 %v463
        %v508 = vunpack.c.l.b16 %v464
        %v509 = vunpack.c.h.b16 %v464
        %v510 = vunpack.c.l.b16 %v465
        %v511 = vunpack.c.h.b16 %v465
        %v512 = vunpack.c.l.b16 %v466
        %v513 = vunpack.c.h.b16 %v466
        %v514 = vunpack.c.l.b16 %v467
        %v515 = vunpack.c.h.b16 %v467
        %v516 = vpack.c.b16 %v486, %v484
        %v517 = vpack.c.b16 %v487, %v485
        %v518 = vpack.c.b16 %v490, %v488
        %v519 = vpack.c.b16 %v491, %v489
        %v520 = vpack.c.b16 %v494, %v492
        %v521 = vpack.c.b16 %v495, %v493
        %v522 = vpack.c.b16 %v498, %v496
        %v523 = vpack.c.b16 %v499, %v497
        %v524 = vpack.c.b16 %v502, %v500
        %v525 = vpack.c.b16 %v503, %v501
        %v526 = vpack.c.b16 %v506, %v504
        %v527 = vpack.c.b16 %v507, %v505
        %v528 = vpack.c.b16 %v510, %v508
        %v529 = vpack.c.b16 %v511, %v509
        %v530 = vpack.c.b16 %v514, %v512
        %v531 = vpack.c.b16 %v515, %v513
        %548 = vmatprep.subr.bf16.mxu0 %v531
        %549 = vmatpush1.bf16.msra.mxu0 %v530
        %550 = vmatprep.subr.bf16.mxu0 %v529
        %551 = vmatpush1.bf16.msra.mxu0 %v528
        %552 = vmatprep.subr.bf16.mxu0 %v527
        %553 = vmatpush1.bf16.msra.mxu0 %v526
        %554 = vmatprep.subr.bf16.mxu0 %v525
        %555 = vmatpush1.bf16.msra.mxu0 %v524
        %556 = vmatprep.subr.bf16.mxu0 %v523
        %557 = vmatpush1.bf16.msra.mxu0 %v522
        %558 = vmatprep.subr.bf16.mxu0 %v521
        %559 = vmatpush1.bf16.msra.mxu0 %v520
        %560 = vmatprep.subr.bf16.mxu0 %v519
        %561 = vmatpush1.bf16.msra.mxu0 %v518
        %562 = vmatprep.subr.bf16.mxu0 %v517
        %563 = vmatpush1.bf16.msra.mxu0 %v516
        %564 = vmatprep.subr.bf16.mxu0 0
        %565 = vmatpush2.bf16.msra.mxu0 0
        %566 = vmatprep.subr.bf16.mxu0 0
        %567 = vmatpush2.bf16.msra.mxu0 0
        %568 = vmatprep.subr.bf16.mxu0 0
        %569 = vmatpush2.bf16.msra.mxu0 0
        %570 = vmatprep.subr.bf16.mxu0 0
        %571 = vmatpush2.bf16.msra.mxu0 0
        %572 = vmatprep.subr.bf16.mxu0 0
        %573 = vmatpush2.bf16.msra.mxu0 0
        %574 = vmatprep.subr.bf16.mxu0 0
        %575 = vmatpush2.bf16.msra.mxu0 0
        %576 = vmatprep.subr.bf16.mxu0 0
        %577 = vmatpush2.bf16.msra.mxu0 0
        %578 = vmatprep.subr.bf16.mxu0 0
        %579 = vmatpush2.bf16.msra.mxu0 0
        %580 = vmatprep.mubr.bf16.mxu0 0
        %581 = vmatmul.mubr.bf16.gmra.mxu0 %v451
        %v582 = vpop.f32.mrf.mxu0
        %v583 = vadd.f32 0.0, %v582
        %v584 = vpop.f32.mrf.mxu0
        %v585 = vadd.f32 0.0, %v584
        %v586 = vpop.f32.mrf.mxu0
        %v587 = vadd.f32 0.0, %v586
        %v588 = vpop.f32.mrf.mxu0
        %v589 = vadd.f32 0.0, %v588
        %590 = vdwg.mxu0
        %v593 = vrot.slane %v583, 7
        %v594 = vrot.slane %v587, 7
        %v595 = vsel %vm434, %v593, %v594
        %v598 = vsel %vm434, 0.0, %v593
        %v599 = vlaneseq
        %v600 = vshrl.u32 %v599, 7
        %v601 = vsub.s32 1, %v600
        %v602 = vrot.slane %v286, %v601
        %v603 = vadd.f32 %v602, %v598
        %v604 = vadd.f32 %v602, %v595
        %v605 = vadd.f32 %v603, %v585
        %v606 = vadd.f32 %v604, %v589
        %v607 = vmax.f32 %v605, 0.0
        %v608 = vmax.f32 %v606, 0.0
        %v609 = vunpack.c.l.bf16 %v284
        %v610 = vunpack.c.l.bf16 %v285
        %v611 = vadd.f32 %v607, %v609
        %v612 = vadd.f32 %v608, %v610
        %v613 = vmax.f32 %v611, 0.0
        %v614 = vmax.f32 %v612, 0.0
        %v615 = vpack.c.bf16 %v614, %v613
        %v617 = vunpack.c.l.b16 %v615
        %v618 = vunpack.c.h.b16 %v615
        %v619 = vpack.c.b16 %v617, %v617
        %v620 = vpack.c.b16 %v618, %v618
        %623 = vst [vmem:[%s275] sm:$0xf] %v619
        %624 = vst [vmem:[%s275 + $0x4] sm:$0xf] %v620
        %v625 = vadd.f32 %v613, %v614
        %v626 = vrot.slane %v625, 4
        %v627 = vadd.f32 %v625, %v626
        %v628 = vrot.slane %v627, 2
        %v629 = vadd.f32 %v627, %v628
        %v630 = vrot.slane %v629, 1
        %v631 = vadd.f32 %v629, %v630
        %v632 = vmul.f32 %v631, 0.0625
        %633 = vst [vmem:[%s282] sm:$0xff] %v632
        %s634 = sand.u32 %s124, 1
        %s635 = scalar_lea.sflag [#allocation4], %s634
        %s636 = sand.u32 %s124, 1
        %s637 = smul.addr %s636, 8
        %s638 = scalar_lea.vmem [#allocation8], %s637
        %s639 = sand.u32 %s150, 1
        %s640 = scalar_lea.sflag [#allocation10], %s639
        %s641 = sand.u32 %s150, 1
        %s642 = smul.addr %s641, 8
        %s643 = scalar_lea.vmem [#allocation9], %s642
        // Predicated region
        $region49: #{tpu_custom_call.1} parent=35 // pred_check
          %p644 = pneg %p134
        $region50: #{tpu_custom_call.1} parent=35 // pred_check_branch
          %646 = sbr.rel (%p644) target = $region52
        $region51: #{tpu_custom_call.1} parent=35 // pred_region
          %s648 = ssub.s32 128, 128
          %649 = vsyncadd %s635, %s648
          %s650 = smul.addr %s27, 2
          %s651 = smul.addr %s650, 64
          %s652 = scalar_lea.hbm %s4, %s651
          %s653 = sshll.u32 %s638, 4
          %s654 = int_to_ptr.vmem [resolvable:$true] %s653
          %659 = dma.vmem_to_hbm [thread:$0]  %s654, 128, %s652, %s635, 64, 64, 4
        $region52: #{tpu_custom_call.1} parent=35 // pred_fallthru
          _
        // Predicated region
        $region53: #{tpu_custom_call.1} parent=35 // pred_check
          %p660 = pneg %p160
        $region54: #{tpu_custom_call.1} parent=35 // pred_check_branch
          %662 = sbr.rel (%p660) target = $region56
        $region55: #{tpu_custom_call.1} parent=35 // pred_region
          %s664 = ssub.s32 128, 128
          %665 = vsyncadd %s640, %s664
          %s666 = smul.addr %s27, 128
          %s667 = scalar_lea.hbm %s5, %s666
          %s669 = sshll.u32 %s643, 4
          %s670 = int_to_ptr.vmem [resolvable:$true] %s669
          %672 = dma.vmem_to_hbm [thread:$0]  %s670, 128, %s667, %s640
        $region56: #{tpu_custom_call.1} parent=35 // pred_fallthru
          _
      $region36: #{tpu_custom_call.1} parent=5 // pred_fallthru
        _
      %p673 = scmp.le.s32.totalorder 2, %s22
      // Predicated region
      $region57: #{tpu_custom_call.1} parent=5 // pred_check
        %p674 = pneg %p673
      $region58: #{tpu_custom_call.1} parent=5 // pred_check_branch
        %676 = sbr.rel (%p674) target = $region60
      $region59: #{tpu_custom_call.1} parent=5 // pred_region
        %s677 = ssub.s32 %s22, 2
        // Predicated region
        $region61: #{tpu_custom_call.1} parent=59 // pred_check
          %p678 = pneg %p140
        $region62: #{tpu_custom_call.1} parent=59 // pred_check_branch
          %680 = sbr.rel (%p678) target = $region64
        $region63: #{tpu_custom_call.1} parent=59 // pred_region
          %s681 = sand.u32 %s125, 1
          %s682 = scalar_lea.sflag [#allocation4], %s681
          %s683 = sand.u32 %s125, 1
          %s684 = smul.addr %s683, 8
          %s685 = scalar_lea.vmem [#allocation8], %s684
          %686 = dma.done %s682, 128
        $region64: #{tpu_custom_call.1} parent=59 // pred_fallthru
          _
        // Predicated region
        $region65: #{tpu_custom_call.1} parent=59 // pred_check
          %p687 = pneg %p166
        $region66: #{tpu_custom_call.1} parent=59 // pred_check_branch
          %689 = sbr.rel (%p687) target = $region68
        $region67: #{tpu_custom_call.1} parent=59 // pred_region
          %s690 = sand.u32 %s151, 1
          %s691 = scalar_lea.sflag [#allocation10], %s690
          %s692 = sand.u32 %s151, 1
          %s693 = smul.addr %s692, 8
          %s694 = scalar_lea.vmem [#allocation9], %s693
          %695 = dma.done %s691, 128
        $region68: #{tpu_custom_call.1} parent=59 // pred_fallthru
          _
      $region60: #{tpu_custom_call.1} parent=5 // pred_fallthru
        _
    $region6: #{tpu_custom_call.1} parent=1 // loop_footer
      %s26 = sadd.s32 1, %s22
    $region7: #{tpu_custom_call.1} parent=1 // loop_footer_branch
      %21 = sbr.rel target = $region3
    $region8: #{tpu_custom_call.1} parent=1 // loop_exit
      _
    %696 = vsyncpa [#allocation3], 1
    %s697 = scalar_lea.sflag [#allocation3], 1
    %698 = vsyncpa %s697, 1
    %699 = vsyncpa [#allocation6], 1
    %700 = vsyncpa [#allocation4], 1
    %s701 = scalar_lea.sflag [#allocation4], 1
    %702 = vsyncpa %s701, 1
    %703 = vsyncpa [#allocation10], 1
    %s704 = scalar_lea.sflag [#allocation10], 1
    %705 = vsyncpa %s704, 1

</llo_original>
